<compile_context>
chip_gen: v6e
topology: v6e:2x2x1
jax: 0.10.0
libtpu: 0.0.40
codegen_flags: <defaults>
</compile_context>

<pallas_src>
import jax
import jax.numpy as jnp
from jax.experimental import pallas as pl
from jax.experimental.pallas import tpu as pltpu


def encoder_gru_kernel(ids_ref, eg_hbm, b_ref, wout_ref, out_ref, x_buf, sems):
    """Fused Embedding gather + single GRU step (h_prev == 0) + Linear(last row).

    ids_ref : (N,)     int32  SMEM (scalar prefetch)   token ids
    eg_hbm  : (V, 3H)  f32    HBM (pl.ANY)  embedding folded into gate weights
                              [T@W_ir | T@W_iz | T@W_in]
    b_ref   : (2, 3H)  f32    VMEM  row 0 = [b_ir+b_hr | b_iz+b_hz | b_in]
                                    row 1 = [b_hn | b_out | 0]
    wout_ref: (H, H)   f32    VMEM  output Linear weight (pre-transposed)
    out_ref : (N+1, H) f32    VMEM  rows 0..N-1 = hidden, row N = Linear(last)
    x_buf   : (N, 3H)  f32    VMEM scratch: gathered gate pre-activations
    sems    : (N,) DMA semaphores

    PyTorch GRU with h_prev = 0:
        r  = sigmoid(W_ir x + b_ir + b_hr)
        z  = sigmoid(W_iz x + b_iz + b_hz)
        n  = tanh  (W_in x + b_in + r * b_hn)
        h' = (1 - z) * n
    """
    n_tok = x_buf.shape[0]
    hidden = wout_ref.shape[0]

    def row_gather(i):
        # Exact gather of one folded-table row: HBM -> VMEM scratch row i.
        return pltpu.make_async_copy(
            eg_hbm.at[pl.ds(ids_ref[i], 1), :],
            x_buf.at[pl.ds(i, 1), :],
            sems.at[i])

    # Issue all N row DMAs back-to-back (N is small & static), then wait.
    for i in range(n_tok):
        row_gather(i).start()
    for i in range(n_tok):
        row_gather(i).wait()

    # Gathered rows already contain x @ [W_ir|W_iz|W_in]; add fused biases.
    pre = x_buf[...] + b_ref[0:1, :]                        # (N, 3H)

    # One EUP pass covers both r and z (contiguous 2H lane block).
    rz = jax.nn.sigmoid(pre[:, 0:2 * hidden])               # (N, 2H)
    r = rz[:, 0:hidden]
    z = rz[:, hidden:2 * hidden]
    b_hn = b_ref[1:2, 0:hidden]                             # (1, H) VPU broadcast
    n = jnp.tanh(pre[:, 2 * hidden:3 * hidden] + r * b_hn)
    h = (1.0 - z) * n                                       # (N, H)  (h_prev == 0)

    # Single lane-dense output slab: hidden rows + Linear(last row).
    out_ref[0:n_tok, :] = h
    b_out = b_ref[1:2, hidden:2 * hidden]                   # (1, H)
    out_ref[n_tok:n_tok + 1, :] = (
        jnp.dot(h[n_tok - 1:n_tok, :], wout_ref[...],
                preferred_element_type=jnp.float32) + b_out)


def init_params(key, input_size, em_size, hidden_size):
    ks = jax.random.split(key, 8)
    scale = 1.0 / jnp.sqrt(hidden_size)
    return {
        "embedding": jax.random.normal(ks[0], (input_size, em_size), jnp.float32),
        # PyTorch GRU weight_ih_l0 is (3H, E) in [r, z, n] order; kept split
        # and pre-transposed to (E, H).
        "w_ir_t": jax.random.uniform(ks[1], (em_size, hidden_size), jnp.float32, -scale, scale),
        "w_iz_t": jax.random.uniform(ks[2], (em_size, hidden_size), jnp.float32, -scale, scale),
        "w_in_t": jax.random.uniform(ks[3], (em_size, hidden_size), jnp.float32, -scale, scale),
        "b_ih": jax.random.uniform(ks[4], (3, hidden_size), jnp.float32, -scale, scale),
        "b_hh": jax.random.uniform(ks[5], (3, hidden_size), jnp.float32, -scale, scale),
        # nn.Linear(hidden, hidden): weight transposed to (H, H), bias (H,)
        "w_out_t": jax.random.uniform(ks[6], (hidden_size, hidden_size), jnp.float32, -scale, scale),
        "b_out": jax.random.uniform(ks[7], (hidden_size,), jnp.float32, -scale, scale),
    }


def pack_params(params):
    """One-time host-side folding (runs at init, not per forward call).

    NOTE: the folding assumes h_prev == 0 (as in the PyTorch module's forward,
    where the GRU is called without an initial hidden state).
    """
    em_size, hidden = params["w_ir_t"].shape
    # Fused gate slab (E, 3H) = [W_ir | W_iz | W_in] (no zero 4th block).
    w_gates = jnp.concatenate(
        [params["w_ir_t"], params["w_iz_t"], params["w_in_t"]], axis=1)
    # Fold the embedding table into the gate weights once; kernel-side the
    # gather of row `id` yields exactly T[id] @ W_gates (bit-exact selection).
    emb_gates = jnp.dot(params["embedding"], w_gates,
                        precision=jax.lax.Precision.HIGHEST)          # (V, 3H)
    b_row0 = jnp.concatenate(
        [params["b_ih"][0] + params["b_hh"][0],
         params["b_ih"][1] + params["b_hh"][1],
         params["b_ih"][2]], axis=0)                                  # (3H,)
    b_row1 = jnp.concatenate(
        [params["b_hh"][2], params["b_out"],
         jnp.zeros((hidden,), jnp.float32)], axis=0)                  # (3H,)
    biases = jnp.stack([b_row0, b_row1], axis=0)                      # (2, 3H)
    return {"emb_gates": emb_gates, "biases": biases,
            "w_out_t": params["w_out_t"]}


@jax.jit
def encoder_rnn_forward(input_ids, packed):
    """Mirrors EncoderRNN.forward: returns (output (1,H), hidden (1,N,H))."""
    vocab, three_h = packed["emb_gates"].shape
    hidden_size = packed["w_out_t"].shape[0]
    # Clamp defends against untrusted ids: a dynamic gather has no HW bounds
    # check on TPU.
    ids = jnp.clip(input_ids.astype(jnp.int32).reshape(-1), 0, vocab - 1)
    n_tok = ids.shape[0]

    grid_spec = pltpu.PrefetchScalarGridSpec(
        num_scalar_prefetch=1,                 # ids land in SMEM before the body
        grid=(1,),                             # token grid only pays off at large N
        in_specs=[
            pl.BlockSpec(memory_space=pl.ANY),                               # table in HBM
            pl.BlockSpec((2, three_h), lambda i, ids_r: (0, 0)),             # biases
            pl.BlockSpec((hidden_size, hidden_size), lambda i, ids_r: (0, 0)),  # w_out
        ],
        out_specs=pl.BlockSpec((n_tok + 1, hidden_size), lambda i, ids_r: (0, 0)),
        scratch_shapes=[
            pltpu.VMEM((n_tok, three_h), jnp.float32),   # gathered rows
            pltpu.SemaphoreType.DMA((n_tok,)),
        ],
    )
    slab = pl.pallas_call(
        encoder_gru_kernel,
        out_shape=jax.ShapeDtypeStruct((n_tok + 1, hidden_size), jnp.float32),
        grid_spec=grid_spec,
        compiler_params=pltpu.CompilerParams(dimension_semantics=("arbitrary",)),
    )(ids, packed["emb_gates"], packed["biases"], packed["w_out_t"])

    output = slab[n_tok:, :]                                  # (1, H)
    hidden = slab[:n_tok, :].reshape(1, n_tok, hidden_size)   # torch GRU hidden layout
    return output, hidden


if __name__ == "__main__":
    input_size = 16   # vocab size
    em_size = 32
    hidden_size = 32
    seq_len = 8

    key = jax.random.PRNGKey(0)
    k_ids, k_params = jax.random.split(key)
    input_ids = jax.random.randint(k_ids, (seq_len,), 0, input_size, dtype=jnp.int32)
    params = init_params(k_params, input_size, em_size, hidden_size)
    packed = pack_params(params)   # one-time folding; kernel sees only 4 operands

    output, hidden = encoder_rnn_forward(input_ids, packed)
    jax.block_until_ready((output, hidden))

    # Pure-JAX reference of Embedding -> GRU step (h0 = 0) -> Linear.
    hp = jax.lax.Precision.HIGHEST
    emb = jnp.take(params["embedding"], input_ids, axis=0)
    r = jax.nn.sigmoid(jnp.dot(emb, params["w_ir_t"], precision=hp)
                       + params["b_ih"][0] + params["b_hh"][0])
    z = jax.nn.sigmoid(jnp.dot(emb, params["w_iz_t"], precision=hp)
                       + params["b_ih"][1] + params["b_hh"][1])
    n = jnp.tanh(jnp.dot(emb, params["w_in_t"], precision=hp)
                 + params["b_ih"][2] + r * params["b_hh"][2])
    h_ref = (1.0 - z) * n
    out_ref_v = h_ref[-1:, :] @ params["w_out_t"] + params["b_out"]

    assert hidden.shape == (1, seq_len, hidden_size)
    assert output.shape == (1, hidden_size)
    # Gate path is an exact row gather now -> tolerance tightened to 1e-5.
    assert jnp.allclose(hidden[0], h_ref, atol=1e-5), "hidden mismatch"
    # Output row still crosses one HxH MXU pass at default f32 precision.
    assert jnp.allclose(output, out_ref_v, atol=1e-4), "output mismatch"

    print("KERNEL_OK")
</pallas_src>

<mosaic_0001>
module attributes {stable_mosaic.version = 11 : i64} {
  func.func @encoder_gru_kernel(%arg0: i32, %arg1: memref<8xi32, #tpu.memory_space<smem>>, %arg2: memref<16x96xf32, #tpu.memory_space<any>>, %arg3: memref<2x96xf32, #tpu.memory_space<vmem>>, %arg4: memref<32x32xf32, #tpu.memory_space<vmem>>, %arg5: memref<9x32xf32, #tpu.memory_space<vmem>>, %arg6: memref<8x96xf32, #tpu.memory_space<vmem>>, %arg7: memref<8x!tpu.dma_semaphore, #tpu.memory_space<semaphore_mem>>) attributes {dimension_semantics = [#tpu.dimension_semantics<arbitrary>], iteration_bounds = array<i64: 1>, scalar_prefetch = 1 : i64, scratch_operands = 2 : i64, tpu.core_type = #tpu.core_type<tc>, window_params = [{}, {pipeline_mode = #tpu.pipeline_mode<synchronous>, transform_indices = @transform_1, window_bounds = array<i64: 2, 96>}, {pipeline_mode = #tpu.pipeline_mode<synchronous>, transform_indices = @transform_2, window_bounds = array<i64: 32, 32>}, {pipeline_mode = #tpu.pipeline_mode<synchronous>, transform_indices = @transform_3, window_bounds = array<i64: 9, 32>}]} {
    %c0 = arith.constant 0 : index
    %0 = memref.load %arg1[%c0] : memref<8xi32, #tpu.memory_space<smem>>
    %c0_i32 = arith.constant 0 : i32
    %c0_i32_0 = arith.constant 0 : i32
    %1 = tpu.memref_slice %arg2[%0, %c0_i32_0] : memref<16x96xf32, #tpu.memory_space<any>> -> memref<1x96xf32, #tpu.memory_space<any>>
    %c0_i32_1 = arith.constant 0 : i32
    %c0_i32_2 = arith.constant 0 : i32
    %2 = tpu.memref_slice %arg6[%c0_i32_1, %c0_i32_2] : memref<8x96xf32, #tpu.memory_space<vmem>> -> memref<1x96xf32, #tpu.memory_space<vmem>>
    %3 = tpu.memref_slice %arg7[%c0_i32] : memref<8x!tpu.dma_semaphore, #tpu.memory_space<semaphore_mem>> -> memref<1x!tpu.dma_semaphore, #tpu.memory_space<semaphore_mem>>
    %4 = tpu.memref_squeeze %3 : memref<1x!tpu.dma_semaphore, #tpu.memory_space<semaphore_mem>> -> memref<!tpu.dma_semaphore, #tpu.memory_space<semaphore_mem>>
    tpu.enqueue_dma source(%1 : memref<1x96xf32, #tpu.memory_space<any>>) target(%2 : memref<1x96xf32, #tpu.memory_space<vmem>>) target_semaphore(%4 : memref<!tpu.dma_semaphore, #tpu.memory_space<semaphore_mem>>)
    %c1 = arith.constant 1 : index
    %5 = memref.load %arg1[%c1] : memref<8xi32, #tpu.memory_space<smem>>
    %c1_i32 = arith.constant 1 : i32
    %c0_i32_3 = arith.constant 0 : i32
    %6 = tpu.memref_slice %arg2[%5, %c0_i32_3] : memref<16x96xf32, #tpu.memory_space<any>> -> memref<1x96xf32, #tpu.memory_space<any>>
    %c1_i32_4 = arith.constant 1 : i32
    %c0_i32_5 = arith.constant 0 : i32
    %7 = tpu.memref_slice %arg6[%c1_i32_4, %c0_i32_5] : memref<8x96xf32, #tpu.memory_space<vmem>> -> memref<1x96xf32, #tpu.memory_space<vmem>>
    %8 = tpu.memref_slice %arg7[%c1_i32] : memref<8x!tpu.dma_semaphore, #tpu.memory_space<semaphore_mem>> -> memref<1x!tpu.dma_semaphore, #tpu.memory_space<semaphore_mem>>
    %9 = tpu.memref_squeeze %8 : memref<1x!tpu.dma_semaphore, #tpu.memory_space<semaphore_mem>> -> memref<!tpu.dma_semaphore, #tpu.memory_space<semaphore_mem>>
    tpu.enqueue_dma source(%6 : memref<1x96xf32, #tpu.memory_space<any>>) target(%7 : memref<1x96xf32, #tpu.memory_space<vmem>>) target_semaphore(%9 : memref<!tpu.dma_semaphore, #tpu.memory_space<semaphore_mem>>)
    %c2 = arith.constant 2 : index
    %10 = memref.load %arg1[%c2] : memref<8xi32, #tpu.memory_space<smem>>
    %c2_i32 = arith.constant 2 : i32
    %c0_i32_6 = arith.constant 0 : i32
    %11 = tpu.memref_slice %arg2[%10, %c0_i32_6] : memref<16x96xf32, #tpu.memory_space<any>> -> memref<1x96xf32, #tpu.memory_space<any>>
    %c2_i32_7 = arith.constant 2 : i32
    %c0_i32_8 = arith.constant 0 : i32
    %12 = tpu.memref_slice %arg6[%c2_i32_7, %c0_i32_8] : memref<8x96xf32, #tpu.memory_space<vmem>> -> memref<1x96xf32, #tpu.memory_space<vmem>>
    %13 = tpu.memref_slice %arg7[%c2_i32] : memref<8x!tpu.dma_semaphore, #tpu.memory_space<semaphore_mem>> -> memref<1x!tpu.dma_semaphore, #tpu.memory_space<semaphore_mem>>
    %14 = tpu.memref_squeeze %13 : memref<1x!tpu.dma_semaphore, #tpu.memory_space<semaphore_mem>> -> memref<!tpu.dma_semaphore, #tpu.memory_space<semaphore_mem>>
    tpu.enqueue_dma source(%11 : memref<1x96xf32, #tpu.memory_space<any>>) target(%12 : memref<1x96xf32, #tpu.memory_space<vmem>>) target_semaphore(%14 : memref<!tpu.dma_semaphore, #tpu.memory_space<semaphore_mem>>)
    %c3 = arith.constant 3 : index
    %15 = memref.load %arg1[%c3] : memref<8xi32, #tpu.memory_space<smem>>
    %c3_i32 = arith.constant 3 : i32
    %c0_i32_9 = arith.constant 0 : i32
    %16 = tpu.memref_slice %arg2[%15, %c0_i32_9] : memref<16x96xf32, #tpu.memory_space<any>> -> memref<1x96xf32, #tpu.memory_space<any>>
    %c3_i32_10 = arith.constant 3 : i32
    %c0_i32_11 = arith.constant 0 : i32
    %17 = tpu.memref_slice %arg6[%c3_i32_10, %c0_i32_11] : memref<8x96xf32, #tpu.memory_space<vmem>> -> memref<1x96xf32, #tpu.memory_space<vmem>>
    %18 = tpu.memref_slice %arg7[%c3_i32] : memref<8x!tpu.dma_semaphore, #tpu.memory_space<semaphore_mem>> -> memref<1x!tpu.dma_semaphore, #tpu.memory_space<semaphore_mem>>
    %19 = tpu.memref_squeeze %18 : memref<1x!tpu.dma_semaphore, #tpu.memory_space<semaphore_mem>> -> memref<!tpu.dma_semaphore, #tpu.memory_space<semaphore_mem>>
    tpu.enqueue_dma source(%16 : memref<1x96xf32, #tpu.memory_space<any>>) target(%17 : memref<1x96xf32, #tpu.memory_space<vmem>>) target_semaphore(%19 : memref<!tpu.dma_semaphore, #tpu.memory_space<semaphore_mem>>)
    %c4 = arith.constant 4 : index
    %20 = memref.load %arg1[%c4] : memref<8xi32, #tpu.memory_space<smem>>
    %c4_i32 = arith.constant 4 : i32
    %c0_i32_12 = arith.constant 0 : i32
    %21 = tpu.memref_slice %arg2[%20, %c0_i32_12] : memref<16x96xf32, #tpu.memory_space<any>> -> memref<1x96xf32, #tpu.memory_space<any>>
    %c4_i32_13 = arith.constant 4 : i32
    %c0_i32_14 = arith.constant 0 : i32
    %22 = tpu.memref_slice %arg6[%c4_i32_13, %c0_i32_14] : memref<8x96xf32, #tpu.memory_space<vmem>> -> memref<1x96xf32, #tpu.memory_space<vmem>>
    %23 = tpu.memref_slice %arg7[%c4_i32] : memref<8x!tpu.dma_semaphore, #tpu.memory_space<semaphore_mem>> -> memref<1x!tpu.dma_semaphore, #tpu.memory_space<semaphore_mem>>
    %24 = tpu.memref_squeeze %23 : memref<1x!tpu.dma_semaphore, #tpu.memory_space<semaphore_mem>> -> memref<!tpu.dma_semaphore, #tpu.memory_space<semaphore_mem>>
    tpu.enqueue_dma source(%21 : memref<1x96xf32, #tpu.memory_space<any>>) target(%22 : memref<1x96xf32, #tpu.memory_space<vmem>>) target_semaphore(%24 : memref<!tpu.dma_semaphore, #tpu.memory_space<semaphore_mem>>)
    %c5 = arith.constant 5 : index
    %25 = memref.load %arg1[%c5] : memref<8xi32, #tpu.memory_space<smem>>
    %c5_i32 = arith.constant 5 : i32
    %c0_i32_15 = arith.constant 0 : i32
    %26 = tpu.memref_slice %arg2[%25, %c0_i32_15] : memref<16x96xf32, #tpu.memory_space<any>> -> memref<1x96xf32, #tpu.memory_space<any>>
    %c5_i32_16 = arith.constant 5 : i32
    %c0_i32_17 = arith.constant 0 : i32
    %27 = tpu.memref_slice %arg6[%c5_i32_16, %c0_i32_17] : memref<8x96xf32, #tpu.memory_space<vmem>> -> memref<1x96xf32, #tpu.memory_space<vmem>>
    %28 = tpu.memref_slice %arg7[%c5_i32] : memref<8x!tpu.dma_semaphore, #tpu.memory_space<semaphore_mem>> -> memref<1x!tpu.dma_semaphore, #tpu.memory_space<semaphore_mem>>
    %29 = tpu.memref_squeeze %28 : memref<1x!tpu.dma_semaphore, #tpu.memory_space<semaphore_mem>> -> memref<!tpu.dma_semaphore, #tpu.memory_space<semaphore_mem>>
    tpu.enqueue_dma source(%26 : memref<1x96xf32, #tpu.memory_space<any>>) target(%27 : memref<1x96xf32, #tpu.memory_space<vmem>>) target_semaphore(%29 : memref<!tpu.dma_semaphore, #tpu.memory_space<semaphore_mem>>)
    %c6 = arith.constant 6 : index
    %30 = memref.load %arg1[%c6] : memref<8xi32, #tpu.memory_space<smem>>
    %c6_i32 = arith.constant 6 : i32
    %c0_i32_18 = arith.constant 0 : i32
    %31 = tpu.memref_slice %arg2[%30, %c0_i32_18] : memref<16x96xf32, #tpu.memory_space<any>> -> memref<1x96xf32, #tpu.memory_space<any>>
    %c6_i32_19 = arith.constant 6 : i32
    %c0_i32_20 = arith.constant 0 : i32
    %32 = tpu.memref_slice %arg6[%c6_i32_19, %c0_i32_20] : memref<8x96xf32, #tpu.memory_space<vmem>> -> memref<1x96xf32, #tpu.memory_space<vmem>>
    %33 = tpu.memref_slice %arg7[%c6_i32] : memref<8x!tpu.dma_semaphore, #tpu.memory_space<semaphore_mem>> -> memref<1x!tpu.dma_semaphore, #tpu.memory_space<semaphore_mem>>
    %34 = tpu.memref_squeeze %33 : memref<1x!tpu.dma_semaphore, #tpu.memory_space<semaphore_mem>> -> memref<!tpu.dma_semaphore, #tpu.memory_space<semaphore_mem>>
    tpu.enqueue_dma source(%31 : memref<1x96xf32, #tpu.memory_space<any>>) target(%32 : memref<1x96xf32, #tpu.memory_space<vmem>>) target_semaphore(%34 : memref<!tpu.dma_semaphore, #tpu.memory_space<semaphore_mem>>)
    %c7 = arith.constant 7 : index
    %35 = memref.load %arg1[%c7] : memref<8xi32, #tpu.memory_space<smem>>
    %c7_i32 = arith.constant 7 : i32
    %c0_i32_21 = arith.constant 0 : i32
    %36 = tpu.memref_slice %arg2[%35, %c0_i32_21] : memref<16x96xf32, #tpu.memory_space<any>> -> memref<1x96xf32, #tpu.memory_space<any>>
    %c7_i32_22 = arith.constant 7 : i32
    %c0_i32_23 = arith.constant 0 : i32
    %37 = tpu.memref_slice %arg6[%c7_i32_22, %c0_i32_23] : memref<8x96xf32, #tpu.memory_space<vmem>> -> memref<1x96xf32, #tpu.memory_space<vmem>>
    %38 = tpu.memref_slice %arg7[%c7_i32] : memref<8x!tpu.dma_semaphore, #tpu.memory_space<semaphore_mem>> -> memref<1x!tpu.dma_semaphore, #tpu.memory_space<semaphore_mem>>
    %39 = tpu.memref_squeeze %38 : memref<1x!tpu.dma_semaphore, #tpu.memory_space<semaphore_mem>> -> memref<!tpu.dma_semaphore, #tpu.memory_space<semaphore_mem>>
    tpu.enqueue_dma source(%36 : memref<1x96xf32, #tpu.memory_space<any>>) target(%37 : memref<1x96xf32, #tpu.memory_space<vmem>>) target_semaphore(%39 : memref<!tpu.dma_semaphore, #tpu.memory_space<semaphore_mem>>)
    %c0_24 = arith.constant 0 : index
    %40 = memref.load %arg1[%c0_24] : memref<8xi32, #tpu.memory_space<smem>>
    %c0_i32_25 = arith.constant 0 : i32
    %c0_i32_26 = arith.constant 0 : i32
    %41 = tpu.memref_slice %arg2[%40, %c0_i32_26] : memref<16x96xf32, #tpu.memory_space<any>> -> memref<1x96xf32, #tpu.memory_space<any>>
    %c0_i32_27 = arith.constant 0 : i32
    %c0_i32_28 = arith.constant 0 : i32
    %42 = tpu.memref_slice %arg6[%c0_i32_27, %c0_i32_28] : memref<8x96xf32, #tpu.memory_space<vmem>> -> memref<1x96xf32, #tpu.memory_space<vmem>>
    %43 = tpu.memref_slice %arg7[%c0_i32_25] : memref<8x!tpu.dma_semaphore, #tpu.memory_space<semaphore_mem>> -> memref<1x!tpu.dma_semaphore, #tpu.memory_space<semaphore_mem>>
    %44 = tpu.memref_squeeze %43 : memref<1x!tpu.dma_semaphore, #tpu.memory_space<semaphore_mem>> -> memref<!tpu.dma_semaphore, #tpu.memory_space<semaphore_mem>>
    tpu.wait_dma2 semaphore(%44 : memref<!tpu.dma_semaphore, #tpu.memory_space<semaphore_mem>>) src(%41 : memref<1x96xf32, #tpu.memory_space<any>>) dst(%42 : memref<1x96xf32, #tpu.memory_space<vmem>>)
    %c1_29 = arith.constant 1 : index
    %45 = memref.load %arg1[%c1_29] : memref<8xi32, #tpu.memory_space<smem>>
    %c1_i32_30 = arith.constant 1 : i32
    %c0_i32_31 = arith.constant 0 : i32
    %46 = tpu.memref_slice %arg2[%45, %c0_i32_31] : memref<16x96xf32, #tpu.memory_space<any>> -> memref<1x96xf32, #tpu.memory_space<any>>
    %c1_i32_32 = arith.constant 1 : i32
    %c0_i32_33 = arith.constant 0 : i32
    %47 = tpu.memref_slice %arg6[%c1_i32_32, %c0_i32_33] : memref<8x96xf32, #tpu.memory_space<vmem>> -> memref<1x96xf32, #tpu.memory_space<vmem>>
    %48 = tpu.memref_slice %arg7[%c1_i32_30] : memref<8x!tpu.dma_semaphore, #tpu.memory_space<semaphore_mem>> -> memref<1x!tpu.dma_semaphore, #tpu.memory_space<semaphore_mem>>
    %49 = tpu.memref_squeeze %48 : memref<1x!tpu.dma_semaphore, #tpu.memory_space<semaphore_mem>> -> memref<!tpu.dma_semaphore, #tpu.memory_space<semaphore_mem>>
    tpu.wait_dma2 semaphore(%49 : memref<!tpu.dma_semaphore, #tpu.memory_space<semaphore_mem>>) src(%46 : memref<1x96xf32, #tpu.memory_space<any>>) dst(%47 : memref<1x96xf32, #tpu.memory_space<vmem>>)
    %c2_34 = arith.constant 2 : index
    %50 = memref.load %arg1[%c2_34] : memref<8xi32, #tpu.memory_space<smem>>
    %c2_i32_35 = arith.constant 2 : i32
    %c0_i32_36 = arith.constant 0 : i32
    %51 = tpu.memref_slice %arg2[%50, %c0_i32_36] : memref<16x96xf32, #tpu.memory_space<any>> -> memref<1x96xf32, #tpu.memory_space<any>>
    %c2_i32_37 = arith.constant 2 : i32
    %c0_i32_38 = arith.constant 0 : i32
    %52 = tpu.memref_slice %arg6[%c2_i32_37, %c0_i32_38] : memref<8x96xf32, #tpu.memory_space<vmem>> -> memref<1x96xf32, #tpu.memory_space<vmem>>
    %53 = tpu.memref_slice %arg7[%c2_i32_35] : memref<8x!tpu.dma_semaphore, #tpu.memory_space<semaphore_mem>> -> memref<1x!tpu.dma_semaphore, #tpu.memory_space<semaphore_mem>>
    %54 = tpu.memref_squeeze %53 : memref<1x!tpu.dma_semaphore, #tpu.memory_space<semaphore_mem>> -> memref<!tpu.dma_semaphore, #tpu.memory_space<semaphore_mem>>
    tpu.wait_dma2 semaphore(%54 : memref<!tpu.dma_semaphore, #tpu.memory_space<semaphore_mem>>) src(%51 : memref<1x96xf32, #tpu.memory_space<any>>) dst(%52 : memref<1x96xf32, #tpu.memory_space<vmem>>)
    %c3_39 = arith.constant 3 : index
    %55 = memref.load %arg1[%c3_39] : memref<8xi32, #tpu.memory_space<smem>>
    %c3_i32_40 = arith.constant 3 : i32
    %c0_i32_41 = arith.constant 0 : i32
    %56 = tpu.memref_slice %arg2[%55, %c0_i32_41] : memref<16x96xf32, #tpu.memory_space<any>> -> memref<1x96xf32, #tpu.memory_space<any>>
    %c3_i32_42 = arith.constant 3 : i32
    %c0_i32_43 = arith.constant 0 : i32
    %57 = tpu.memref_slice %arg6[%c3_i32_42, %c0_i32_43] : memref<8x96xf32, #tpu.memory_space<vmem>> -> memref<1x96xf32, #tpu.memory_space<vmem>>
    %58 = tpu.memref_slice %arg7[%c3_i32_40] : memref<8x!tpu.dma_semaphore, #tpu.memory_space<semaphore_mem>> -> memref<1x!tpu.dma_semaphore, #tpu.memory_space<semaphore_mem>>
    %59 = tpu.memref_squeeze %58 : memref<1x!tpu.dma_semaphore, #tpu.memory_space<semaphore_mem>> -> memref<!tpu.dma_semaphore, #tpu.memory_space<semaphore_mem>>
    tpu.wait_dma2 semaphore(%59 : memref<!tpu.dma_semaphore, #tpu.memory_space<semaphore_mem>>) src(%56 : memref<1x96xf32, #tpu.memory_space<any>>) dst(%57 : memref<1x96xf32, #tpu.memory_space<vmem>>)
    %c4_44 = arith.constant 4 : index
    %60 = memref.load %arg1[%c4_44] : memref<8xi32, #tpu.memory_space<smem>>
    %c4_i32_45 = arith.constant 4 : i32
    %c0_i32_46 = arith.constant 0 : i32
    %61 = tpu.memref_slice %arg2[%60, %c0_i32_46] : memref<16x96xf32, #tpu.memory_space<any>> -> memref<1x96xf32, #tpu.memory_space<any>>
    %c4_i32_47 = arith.constant 4 : i32
    %c0_i32_48 = arith.constant 0 : i32
    %62 = tpu.memref_slice %arg6[%c4_i32_47, %c0_i32_48] : memref<8x96xf32, #tpu.memory_space<vmem>> -> memref<1x96xf32, #tpu.memory_space<vmem>>
    %63 = tpu.memref_slice %arg7[%c4_i32_45] : memref<8x!tpu.dma_semaphore, #tpu.memory_space<semaphore_mem>> -> memref<1x!tpu.dma_semaphore, #tpu.memory_space<semaphore_mem>>
    %64 = tpu.memref_squeeze %63 : memref<1x!tpu.dma_semaphore, #tpu.memory_space<semaphore_mem>> -> memref<!tpu.dma_semaphore, #tpu.memory_space<semaphore_mem>>
    tpu.wait_dma2 semaphore(%64 : memref<!tpu.dma_semaphore, #tpu.memory_space<semaphore_mem>>) src(%61 : memref<1x96xf32, #tpu.memory_space<any>>) dst(%62 : memref<1x96xf32, #tpu.memory_space<vmem>>)
    %c5_49 = arith.constant 5 : index
    %65 = memref.load %arg1[%c5_49] : memref<8xi32, #tpu.memory_space<smem>>
    %c5_i32_50 = arith.constant 5 : i32
    %c0_i32_51 = arith.constant 0 : i32
    %66 = tpu.memref_slice %arg2[%65, %c0_i32_51] : memref<16x96xf32, #tpu.memory_space<any>> -> memref<1x96xf32, #tpu.memory_space<any>>
    %c5_i32_52 = arith.constant 5 : i32
    %c0_i32_53 = arith.constant 0 : i32
    %67 = tpu.memref_slice %arg6[%c5_i32_52, %c0_i32_53] : memref<8x96xf32, #tpu.memory_space<vmem>> -> memref<1x96xf32, #tpu.memory_space<vmem>>
    %68 = tpu.memref_slice %arg7[%c5_i32_50] : memref<8x!tpu.dma_semaphore, #tpu.memory_space<semaphore_mem>> -> memref<1x!tpu.dma_semaphore, #tpu.memory_space<semaphore_mem>>
    %69 = tpu.memref_squeeze %68 : memref<1x!tpu.dma_semaphore, #tpu.memory_space<semaphore_mem>> -> memref<!tpu.dma_semaphore, #tpu.memory_space<semaphore_mem>>
    tpu.wait_dma2 semaphore(%69 : memref<!tpu.dma_semaphore, #tpu.memory_space<semaphore_mem>>) src(%66 : memref<1x96xf32, #tpu.memory_space<any>>) dst(%67 : memref<1x96xf32, #tpu.memory_space<vmem>>)
    %c6_54 = arith.constant 6 : index
    %70 = memref.load %arg1[%c6_54] : memref<8xi32, #tpu.memory_space<smem>>
    %c6_i32_55 = arith.constant 6 : i32
    %c0_i32_56 = arith.constant 0 : i32
    %71 = tpu.memref_slice %arg2[%70, %c0_i32_56] : memref<16x96xf32, #tpu.memory_space<any>> -> memref<1x96xf32, #tpu.memory_space<any>>
    %c6_i32_57 = arith.constant 6 : i32
    %c0_i32_58 = arith.constant 0 : i32
    %72 = tpu.memref_slice %arg6[%c6_i32_57, %c0_i32_58] : memref<8x96xf32, #tpu.memory_space<vmem>> -> memref<1x96xf32, #tpu.memory_space<vmem>>
    %73 = tpu.memref_slice %arg7[%c6_i32_55] : memref<8x!tpu.dma_semaphore, #tpu.memory_space<semaphore_mem>> -> memref<1x!tpu.dma_semaphore, #tpu.memory_space<semaphore_mem>>
    %74 = tpu.memref_squeeze %73 : memref<1x!tpu.dma_semaphore, #tpu.memory_space<semaphore_mem>> -> memref<!tpu.dma_semaphore, #tpu.memory_space<semaphore_mem>>
    tpu.wait_dma2 semaphore(%74 : memref<!tpu.dma_semaphore, #tpu.memory_space<semaphore_mem>>) src(%71 : memref<1x96xf32, #tpu.memory_space<any>>) dst(%72 : memref<1x96xf32, #tpu.memory_space<vmem>>)
    %c7_59 = arith.constant 7 : index
    %75 = memref.load %arg1[%c7_59] : memref<8xi32, #tpu.memory_space<smem>>
    %c7_i32_60 = arith.constant 7 : i32
    %c0_i32_61 = arith.constant 0 : i32
    %76 = tpu.memref_slice %arg2[%75, %c0_i32_61] : memref<16x96xf32, #tpu.memory_space<any>> -> memref<1x96xf32, #tpu.memory_space<any>>
    %c7_i32_62 = arith.constant 7 : i32
    %c0_i32_63 = arith.constant 0 : i32
    %77 = tpu.memref_slice %arg6[%c7_i32_62, %c0_i32_63] : memref<8x96xf32, #tpu.memory_space<vmem>> -> memref<1x96xf32, #tpu.memory_space<vmem>>
    %78 = tpu.memref_slice %arg7[%c7_i32_60] : memref<8x!tpu.dma_semaphore, #tpu.memory_space<semaphore_mem>> -> memref<1x!tpu.dma_semaphore, #tpu.memory_space<semaphore_mem>>
    %79 = tpu.memref_squeeze %78 : memref<1x!tpu.dma_semaphore, #tpu.memory_space<semaphore_mem>> -> memref<!tpu.dma_semaphore, #tpu.memory_space<semaphore_mem>>
    tpu.wait_dma2 semaphore(%79 : memref<!tpu.dma_semaphore, #tpu.memory_space<semaphore_mem>>) src(%76 : memref<1x96xf32, #tpu.memory_space<any>>) dst(%77 : memref<1x96xf32, #tpu.memory_space<vmem>>)
    %c0_64 = arith.constant 0 : index
    %c0_65 = arith.constant 0 : index
    %80 = vector.load %arg6[%c0_64, %c0_65] : memref<8x96xf32, #tpu.memory_space<vmem>>, vector<8x96xf32>
    %c0_66 = arith.constant 0 : index
    %c0_67 = arith.constant 0 : index
    %81 = vector.load %arg3[%c0_66, %c0_67] : memref<2x96xf32, #tpu.memory_space<vmem>>, vector<1x96xf32>
    %82 = vector.broadcast %81 : vector<1x96xf32> to vector<8x96xf32>
    %83 = arith.addf %80, %82 : vector<8x96xf32>
    %84 = vector.extract_strided_slice %83 {offsets = [0, 0], sizes = [8, 64], strides = [1, 1]} : vector<8x96xf32> to vector<8x64xf32>
    %85 = arith.negf %84 : vector<8x64xf32>
    %86 = math.exp %85 : vector<8x64xf32>
    %cst = arith.constant 1.000000e+00 : f32
    %87 = vector.broadcast %cst : f32 to vector<8x64xf32>
    %88 = arith.addf %87, %86 : vector<8x64xf32>
    %89 = arith.divf %87, %88 : vector<8x64xf32>
    %90 = vector.extract_strided_slice %89 {offsets = [0, 0], sizes = [8, 32], strides = [1, 1]} : vector<8x64xf32> to vector<8x32xf32>
    %91 = vector.extract_strided_slice %89 {offsets = [0, 32], sizes = [8, 32], strides = [1, 1]} : vector<8x64xf32> to vector<8x32xf32>
    %c1_68 = arith.constant 1 : index
    %c0_69 = arith.constant 0 : index
    %92 = vector.load %arg3[%c1_68, %c0_69] : memref<2x96xf32, #tpu.memory_space<vmem>>, vector<1x32xf32>
    %93 = vector.extract_strided_slice %83 {offsets = [0, 64], sizes = [8, 32], strides = [1, 1]} : vector<8x96xf32> to vector<8x32xf32>
    %94 = vector.broadcast %92 : vector<1x32xf32> to vector<8x32xf32>
    %95 = arith.mulf %90, %94 : vector<8x32xf32>
    %96 = arith.addf %93, %95 : vector<8x32xf32>
    %97 = math.tanh %96 : vector<8x32xf32>
    %cst_70 = arith.constant 1.000000e+00 : f32
    %98 = vector.broadcast %cst_70 : f32 to vector<8x32xf32>
    %99 = arith.subf %98, %91 : vector<8x32xf32>
    %100 = arith.mulf %99, %97 : vector<8x32xf32>
    %c0_71 = arith.constant 0 : index
    %c0_72 = arith.constant 0 : index
    %101 = vector.load %arg5[%c0_71, %c0_72] : memref<9x32xf32, #tpu.memory_space<vmem>>, vector<8x32xf32>
    tpu.vector_store %arg5[%c0_71, %c0_72], %100 {strides = array<i32>} : memref<9x32xf32, #tpu.memory_space<vmem>>, vector<8x32xf32>,
    %c1_73 = arith.constant 1 : index
    %c32 = arith.constant 32 : index
    %102 = vector.load %arg3[%c1_73, %c32] : memref<2x96xf32, #tpu.memory_space<vmem>>, vector<1x32xf32>
    %103 = vector.extract_strided_slice %100 {offsets = [7, 0], sizes = [1, 32], strides = [1, 1]} : vector<8x32xf32> to vector<1x32xf32>
    %c0_74 = arith.constant 0 : index
    %c0_75 = arith.constant 0 : index
    %104 = vector.load %arg4[%c0_74, %c0_75] : memref<32x32xf32, #tpu.memory_space<vmem>>, vector<32x32xf32>
    %cst_76 = arith.constant dense<0.000000e+00> : vector<1x32xf32>
    %105 = tpu.matmul %103, %104, %cst_76 {dimension_numbers = #tpu.dot_dimension_numbers<[1], [0], [0], [1], [0, 0, 1, 1], [], []>} : vector<1x32xf32>, vector<32x32xf32>, vector<1x32xf32> -> vector<1x32xf32>
    %106 = arith.addf %105, %102 : vector<1x32xf32>
    %c8 = arith.constant 8 : index
    %c0_77 = arith.constant 0 : index
    %107 = vector.load %arg5[%c8, %c0_77] : memref<9x32xf32, #tpu.memory_space<vmem>>, vector<1x32xf32>
    tpu.vector_store %arg5[%c8, %c0_77], %106 {strides = array<i32>} : memref<9x32xf32, #tpu.memory_space<vmem>>, vector<1x32xf32>,
    return
  }
  func.func @transform_1(%arg0: i32, %arg1: memref<8xi32, #tpu.memory_space<smem>>) -> (i32, i32) {
    %c0_i32 = arith.constant 0 : i32
    %c0_i32_0 = arith.constant 0 : i32
    %c0_i32_1 = arith.constant 0 : i32
    return %c0_i32, %c0_i32_0 : i32, i32
  }
  func.func @transform_2(%arg0: i32, %arg1: memref<8xi32, #tpu.memory_space<smem>>) -> (i32, i32) {
    %c0_i32 = arith.constant 0 : i32
    %c0_i32_0 = arith.constant 0 : i32
    %c0_i32_1 = arith.constant 0 : i32
    return %c0_i32, %c0_i32_0 : i32, i32
  }
  func.func @transform_3(%arg0: i32, %arg1: memref<8xi32, #tpu.memory_space<smem>>) -> (i32, i32) {
    %c0_i32 = arith.constant 0 : i32
    %c0_i32_0 = arith.constant 0 : i32
    %c0_i32_1 = arith.constant 0 : i32
    return %c0_i32, %c0_i32_0 : i32, i32
  }
}

</mosaic_0001>

<llo_original>
// kernel: encoder_rnn_forward.1
$region0: #{encoder_rnn_forward.1}
  #allocation0 [shape = 'u32[]', space=smem, size = 0x4, offset = 0x4, fixed_abs, tag = 'smem constant byte address 0x4 - core index']
  #allocation1 [shape = 'u32[144,128]{1,0:T(1,128)}', space=vmem, size = 0x12000, scoped, tag = 'internal scratch']
  #allocation2 [shape = 'f32[8,96]{1,0:T(8,128)}', space=vmem, size = 0x1000, scoped, tag = 'scratch operand']
  #allocation3 [shape = 's32[8]{0}', space=sflag, size = 0x20, scoped, tag = 'scratch operand']
  #allocation4 [shape = 's32[1]{0}', space=sflag, size = 0x4, scoped, tag = 'scoped memory for encoder_rnn_forward.1']
  #allocation5 [shape = 'u8[512]{0}', space=smem, size = 0x200, scoped, tag = 'prefetched SMEM operand 0']
  #allocation8 [shape = 's32[]', space=sflag, size = 0x4, offset = 0, fixed_abs, tag = 'sflag constant byte address 0x0 - dummy sync flag']
  #allocation9 [shape = 's32[]', space=sflag, size = 0x4, offset = 0, fixed_abs, tag = 'sflag constant byte address 0x0 - dummy sync flag']
  #allocation10 [shape = 'u32[]', space=smem, size = 0x4, offset = 0x44, fixed_abs, tag = 'smem constant byte address 0x44 - assertion arg 0']
  #allocation11 [shape = 'u32[]', space=smem, size = 0x4, offset = 0x48, fixed_abs, tag = 'smem constant byte address 0x48 - assertion arg 1']
  #allocation12 [shape = 's32[]', space=sflag, size = 0x4, offset = 0, fixed_abs, tag = 'sflag constant byte address 0x0 - dummy sync flag']
  #allocation13 [shape = 's32[]', space=sflag, size = 0x4, offset = 0, fixed_abs, tag = 'sflag constant byte address 0x0 - dummy sync flag']
  #allocation14 [shape = 's32[]', space=sflag, size = 0x4, offset = 0, fixed_abs, tag = 'sflag constant byte address 0x0 - dummy sync flag']
  #allocation15 [shape = 's32[]', space=sflag, size = 0x4, offset = 0, fixed_abs, tag = 'sflag constant byte address 0x0 - dummy sync flag']
  #allocation16 [shape = 's32[]', space=sflag, size = 0x4, offset = 0, fixed_abs, tag = 'sflag constant byte address 0x0 - dummy sync flag']
  #allocation17 [shape = 's32[]', space=sflag, size = 0x4, offset = 0, fixed_abs, tag = 'sflag constant byte address 0x0 - dummy sync flag']
  #allocation18 [shape = 's32[]', space=sflag, size = 0x4, offset = 0, fixed_abs, tag = 'sflag constant byte address 0x0 - dummy sync flag']
  #allocation19 [shape = 's32[]', space=sflag, size = 0x4, offset = 0, fixed_abs, tag = 'sflag constant byte address 0x0 - dummy sync flag']
  #allocation20 [shape = 's32[]', space=sflag, size = 0x4, offset = 0, fixed_abs, tag = 'sflag constant byte address 0x0 - dummy sync flag']
  #allocation21 [shape = 's32[]', space=sflag, size = 0x4, offset = 0, fixed_abs, tag = 'sflag constant byte address 0x0 - dummy sync flag']
  #allocation22 [shape = 's32[]', space=sflag, size = 0x4, offset = 0, fixed_abs, tag = 'sflag constant byte address 0x0 - dummy sync flag']
  #allocation23 [shape = 's32[]', space=sflag, size = 0x4, offset = 0, fixed_abs, tag = 'sflag constant byte address 0x0 - dummy sync flag']
  #allocation24 [shape = 's32[]', space=sflag, size = 0x4, offset = 0, fixed_abs, tag = 'sflag constant byte address 0x0 - dummy sync flag']
  #allocation25 [shape = 's32[]', space=sflag, size = 0x4, offset = 0, fixed_abs, tag = 'sflag constant byte address 0x0 - dummy sync flag']
  %s0 = inlined_call_operand.vmem [shape: s32[8], index: 0, kind: input, shape index: {}]
  %s1 = inlined_call_operand.hbm [shape: f32[16,96], index: 1, kind: input, shape index: {}]
  %s2 = inlined_call_operand.vmem [shape: f32[2,96], index: 2, kind: input, shape index: {}]
  %s3 = inlined_call_operand.hbm [shape: f32[32,32], index: 3, kind: input, shape index: {}]
  %s4 = inlined_call_operand.vmem [shape: f32[9,32], index: 4, kind: output, shape index: {}]
  %s5 = sld [smem:[#allocation0]]
  $region54: #{encoder_rnn_forward.1} parent=0
    _
  %s7 = ssub.s32 1, %s5
  %s8 = scalar_select 0, %s7, %s5
  %s9 = sshll.u32 %s0, 4
  %s10 = int_to_ptr.vmem [resolvable:$true] %s9
  %12 = dma.vmem_to_smem %s10, 16, [#allocation5], [#allocation4]
  %13 = dma.done [#allocation4], 16
  %14 = sfence
  $region1: #{encoder_rnn_forward.1} parent=0
    #allocation6 [shape = 'u8[16384]{0}', space=vmem, size = 0x4000, scoped, tag = 'input window, operand 3, single buffered']
    #allocation7 [shape = 's32[1]{0}', space=sflag, size = 0x4, scoped, tag = 'scoped memory for encoder_rnn_forward.1']
    %15 = vsyncpa [#allocation7], 0
    // Predicated region
    $region2: #{encoder_rnn_forward.1} parent=1 // pred_check
      _
    $region3: #{encoder_rnn_forward.1} parent=1 // pred_check_branch
      %17 = sbr.rel (0) target = $region5
    $region4: #{encoder_rnn_forward.1} parent=1 // pred_region
      _
    $region5: #{encoder_rnn_forward.1} parent=1 // pred_fallthru
      _
    // Predicated region
    $region6: #{encoder_rnn_forward.1} parent=1 // pred_check
      _
    $region7: #{encoder_rnn_forward.1} parent=1 // pred_check_branch
      %19 = sbr.rel (0) target = $region9
    $region8: #{encoder_rnn_forward.1} parent=1 // pred_region
      %s21 = ssub.s32 512, 512
      %22 = vsyncadd [#allocation7], %s21
      %s23 = sshll.u32 [#allocation6], 4
      %s24 = int_to_ptr.vmem [resolvable:$true] %s23
      %29 = dma.hbm_to_vmem [thread:$0]  %s3, 512, %s24, [#allocation7], 128, 128, 8
    $region9: #{encoder_rnn_forward.1} parent=1 // pred_fallthru
      _
    // Predicated region
    $region10: #{encoder_rnn_forward.1} parent=1 // pred_check
      _
    $region11: #{encoder_rnn_forward.1} parent=1 // pred_check_branch
      %31 = sbr.rel (0) target = $region13
    $region12: #{encoder_rnn_forward.1} parent=1 // pred_region
      %32 = dma.done [#allocation7], 512
    $region13: #{encoder_rnn_forward.1} parent=1 // pred_fallthru
      _
    %s33 = sld [smem:[#allocation5]]
    %s34 = smul.addr %s33, 16
    %s35 = scalar_lea.hbm %s1, %s34
    // Predicated region
    $region14: #{encoder_rnn_forward.1} parent=1 // pred_check
      _
    $region15: #{encoder_rnn_forward.1} parent=1 // pred_check_branch
      %37 = sbr.rel target = $region17
    $region16: #{encoder_rnn_forward.1} parent=1 // pred_region
      %38 = sst [smem:[#allocation10]] [#allocation9]
      %39 = sst [smem:[#allocation11]] [#allocation8]
    $region17: #{encoder_rnn_forward.1} parent=1 // pred_fallthru
      _
    %41 = shalt.err (0)
    %s43 = sshll.u32 [#allocation2], 4
    %s44 = int_to_ptr.vmem [resolvable:$true] %s43
    %46 = dma.hbm_to_vmem [thread:$0]  %s35, 16, %s44, [#allocation3]
    %s47 = sld [smem:[#allocation5 + $0x1]]
    %s48 = smul.addr %s47, 16
    %s49 = scalar_lea.hbm %s1, %s48
    %s50 = scalar_lea.vmem [#allocation2], 1
    %s51 = scalar_lea.sflag [#allocation3], 1
    // Predicated region
    $region18: #{encoder_rnn_forward.1} parent=1 // pred_check
      _
    $region19: #{encoder_rnn_forward.1} parent=1 // pred_check_branch
      %53 = sbr.rel target = $region21
    $region20: #{encoder_rnn_forward.1} parent=1 // pred_region
      %54 = sst [smem:[#allocation10]] [#allocation13]
      %55 = sst [smem:[#allocation11]] [#allocation12]
    $region21: #{encoder_rnn_forward.1} parent=1 // pred_fallthru
      _
    %57 = shalt.err (0)
    %s59 = sshll.u32 %s50, 4
    %s60 = int_to_ptr.vmem [resolvable:$true] %s59
    %62 = dma.hbm_to_vmem [thread:$0]  %s49, 16, %s60, %s51
    %s63 = sld [smem:[#allocation5 + $0x2]]
    %s64 = smul.addr %s63, 16
    %s65 = scalar_lea.hbm %s1, %s64
    %s66 = scalar_lea.vmem [#allocation2], 2
    %s67 = scalar_lea.sflag [#allocation3], 2
    // Predicated region
    $region22: #{encoder_rnn_forward.1} parent=1 // pred_check
      _
    $region23: #{encoder_rnn_forward.1} parent=1 // pred_check_branch
      %69 = sbr.rel target = $region25
    $region24: #{encoder_rnn_forward.1} parent=1 // pred_region
      %70 = sst [smem:[#allocation10]] [#allocation15]
      %71 = sst [smem:[#allocation11]] [#allocation14]
    $region25: #{encoder_rnn_forward.1} parent=1 // pred_fallthru
      _
    %73 = shalt.err (0)
    %s75 = sshll.u32 %s66, 4
    %s76 = int_to_ptr.vmem [resolvable:$true] %s75
    %78 = dma.hbm_to_vmem [thread:$0]  %s65, 16, %s76, %s67
    %s79 = sld [smem:[#allocation5 + $0x3]]
    %s80 = smul.addr %s79, 16
    %s81 = scalar_lea.hbm %s1, %s80
    %s82 = scalar_lea.vmem [#allocation2], 3
    %s83 = scalar_lea.sflag [#allocation3], 3
    // Predicated region
    $region26: #{encoder_rnn_forward.1} parent=1 // pred_check
      _
    $region27: #{encoder_rnn_forward.1} parent=1 // pred_check_branch
      %85 = sbr.rel target = $region29
    $region28: #{encoder_rnn_forward.1} parent=1 // pred_region
      %86 = sst [smem:[#allocation10]] [#allocation17]
      %87 = sst [smem:[#allocation11]] [#allocation16]
    $region29: #{encoder_rnn_forward.1} parent=1 // pred_fallthru
      _
    %89 = shalt.err (0)
    %s91 = sshll.u32 %s82, 4
    %s92 = int_to_ptr.vmem [resolvable:$true] %s91
    %94 = dma.hbm_to_vmem [thread:$0]  %s81, 16, %s92, %s83
    %s95 = sld [smem:[#allocation5 + $0x4]]
    %s96 = smul.addr %s95, 16
    %s97 = scalar_lea.hbm %s1, %s96
    %s98 = scalar_lea.vmem [#allocation2], 4
    %s99 = scalar_lea.sflag [#allocation3], 4
    // Predicated region
    $region30: #{encoder_rnn_forward.1} parent=1 // pred_check
      _
    $region31: #{encoder_rnn_forward.1} parent=1 // pred_check_branch
      %101 = sbr.rel target = $region33
    $region32: #{encoder_rnn_forward.1} parent=1 // pred_region
      %102 = sst [smem:[#allocation10]] [#allocation19]
      %103 = sst [smem:[#allocation11]] [#allocation18]
    $region33: #{encoder_rnn_forward.1} parent=1 // pred_fallthru
      _
    %105 = shalt.err (0)
    %s107 = sshll.u32 %s98, 4
    %s108 = int_to_ptr.vmem [resolvable:$true] %s107
    %110 = dma.hbm_to_vmem [thread:$0]  %s97, 16, %s108, %s99
    %s111 = sld [smem:[#allocation5 + $0x5]]
    %s112 = smul.addr %s111, 16
    %s113 = scalar_lea.hbm %s1, %s112
    %s114 = scalar_lea.vmem [#allocation2], 5
    %s115 = scalar_lea.sflag [#allocation3], 5
    // Predicated region
    $region34: #{encoder_rnn_forward.1} parent=1 // pred_check
      _
    $region35: #{encoder_rnn_forward.1} parent=1 // pred_check_branch
      %117 = sbr.rel target = $region37
    $region36: #{encoder_rnn_forward.1} parent=1 // pred_region
      %118 = sst [smem:[#allocation10]] [#allocation21]
      %119 = sst [smem:[#allocation11]] [#allocation20]
    $region37: #{encoder_rnn_forward.1} parent=1 // pred_fallthru
      _
    %121 = shalt.err (0)
    %s123 = sshll.u32 %s114, 4
    %s124 = int_to_ptr.vmem [resolvable:$true] %s123
    %126 = dma.hbm_to_vmem [thread:$0]  %s113, 16, %s124, %s115
    %s127 = sld [smem:[#allocation5 + $0x6]]
    %s128 = smul.addr %s127, 16
    %s129 = scalar_lea.hbm %s1, %s128
    %s130 = scalar_lea.vmem [#allocation2], 6
    %s131 = scalar_lea.sflag [#allocation3], 6
    // Predicated region
    $region38: #{encoder_rnn_forward.1} parent=1 // pred_check
      _
    $region39: #{encoder_rnn_forward.1} parent=1 // pred_check_branch
      %133 = sbr.rel target = $region41
    $region40: #{encoder_rnn_forward.1} parent=1 // pred_region
      %134 = sst [smem:[#allocation10]] [#allocation23]
      %135 = sst [smem:[#allocation11]] [#allocation22]
    $region41: #{encoder_rnn_forward.1} parent=1 // pred_fallthru
      _
    %137 = shalt.err (0)
    %s139 = sshll.u32 %s130, 4
    %s140 = int_to_ptr.vmem [resolvable:$true] %s139
    %142 = dma.hbm_to_vmem [thread:$0]  %s129, 16, %s140, %s131
    %s143 = sld [smem:[#allocation5 + $0x7]]
    %s144 = smul.addr %s143, 16
    %s145 = scalar_lea.hbm %s1, %s144
    %s146 = scalar_lea.vmem [#allocation2], 7
    %s147 = scalar_lea.sflag [#allocation3], 7
    // Predicated region
    $region42: #{encoder_rnn_forward.1} parent=1 // pred_check
      _
    $region43: #{encoder_rnn_forward.1} parent=1 // pred_check_branch
      %149 = sbr.rel target = $region45
    $region44: #{encoder_rnn_forward.1} parent=1 // pred_region
      %150 = sst [smem:[#allocation10]] [#allocation25]
      %151 = sst [smem:[#allocation11]] [#allocation24]
    $region45: #{encoder_rnn_forward.1} parent=1 // pred_fallthru
      _
    %153 = shalt.err (0)
    %s155 = sshll.u32 %s146, 4
    %s156 = int_to_ptr.vmem [resolvable:$true] %s155
    %158 = dma.hbm_to_vmem [thread:$0]  %s145, 16, %s156, %s147
    %s159 = sld [smem:[#allocation5]]
    %s160 = smul.u32 1, 1
    %s161 = sshll.u32 %s160, 4
    %162 = dma.done [#allocation3], %s161
    %s163 = sld [smem:[#allocation5 + $0x1]]
    %s164 = sshll.u32 %s160, 4
    %165 = dma.done %s51, %s164
    %s166 = sld [smem:[#allocation5 + $0x2]]
    %s167 = sshll.u32 %s160, 4
    %168 = dma.done %s67, %s167
    %s169 = sld [smem:[#allocation5 + $0x3]]
    %s170 = sshll.u32 %s160, 4
    %171 = dma.done %s83, %s170
    %s172 = sld [smem:[#allocation5 + $0x4]]
    %s173 = sshll.u32 %s160, 4
    %174 = dma.done %s99, %s173
    %s175 = sld [smem:[#allocation5 + $0x5]]
    %s176 = sshll.u32 %s160, 4
    %177 = dma.done %s115, %s176
    %s178 = sld [smem:[#allocation5 + $0x6]]
    %s179 = sshll.u32 %s160, 4
    %180 = dma.done %s131, %s179
    %s181 = sld [smem:[#allocation5 + $0x7]]
    %s182 = sshll.u32 %s160, 4
    %183 = dma.done %s147, %s182
    %v184 = vld [vmem:[#allocation2] sm:$0xff]
    %v185 = vld [vmem:[%s2] sm:$0x1]
    %v186 = vlaneseq
    %v187 = vshrl.u32 %v186, 7
    %v188 = vsub.s32 0, %v187
    %v189 = vrot.slane %v185, %v188
    %v190 = vadd.f32 %v184, %v189
    %v191 = vxor.u32 %v190, 2147483648
    %v192 = vmul.f32 %v191, 1.442695
    %v193 = vpow.pop %v192
    %v194 = vadd.f32 %v193, 1.0
    %v195 = vrcp.pop %v194
    %v196 = vmul.f32 1.0, %v195
    %v197 = vld [vmem:[%s2 + $0x1] sm:$0x1]
    %v198 = vlaneseq
    %v199 = vshrl.u32 %v198, 7
    %v200 = vsub.s32 0, %v199
    %v201 = vrot.slane %v197, %v200
    %v202 = vmul.f32 %v196, %v201
    %204 = vrot.lane.b32.xlu0 %v202, 64
    %v205 = vpop.permute.xlu0 %204
    %v207 = vadd.f32 %v190, %v205
    %v208 = vtanh.pop %v207
    %v209 = vsub.f32 1.0, %v196
    %211 = vrot.lane.b32.xlu0 %v208, 96
    %v212 = vpop.permute.xlu0 %211
    %v214 = vmul.f32 %v209, %v212
    %216 = vrot.lane.b32.xlu0 %v214, 96
    %v217 = vpop.permute.xlu0 %216
    %vm219 = vcmask 261120
    %220 = vst.msk [vmem:[%s4] sm:$0xff] %vm219, %v217
    %v221 = vld [vmem:[%s2 + $0x1] sm:$0x1]
    %v222 = vld [vmem:[#allocation6] sm:$0xff]
    %v223 = vld [vmem:[#allocation6 + $0x8] sm:$0xff]
    %v224 = vld [vmem:[#allocation6 + $0x10] sm:$0xff]
    %v225 = vld [vmem:[#allocation6 + $0x18] sm:$0xff]
    %v226 = vrot.slane %v214, 7
    %227 = vrot.lane.b32.xlu0 %v226, 96
    %v228 = vpop.permute.xlu0 %227
    %230 = vrot.lane.b32.xlu0 %v221, 96
    %v231 = vpop.permute.xlu0 %230
    %v233 = vsel %vm219, %v228, 0
    %235 = vmatprep.subr.mxu0 0.0
    %236 = vmatpush1.msra.mxu0 0.0
    %237 = vmatprep.subr.mxu0 0.0
    %238 = vmatpush1.msra.mxu0 0.0
    %239 = vmatprep.subr.mxu0 0.0
    %240 = vmatpush1.msra.mxu0 0.0
    %241 = vmatprep.subr.mxu0 0.0
    %242 = vmatpush1.msra.mxu0 0.0
    %243 = vmatprep.subr.mxu0 0.0
    %244 = vmatpush1.msra.mxu0 0.0
    %245 = vmatprep.subr.mxu0 0.0
    %246 = vmatpush1.msra.mxu0 0.0
    %247 = vmatprep.subr.mxu0 0.0
    %248 = vmatpush1.msra.mxu0 0.0
    %249 = vmatprep.subr.mxu0 0.0
    %250 = vmatpush1.msra.mxu0 0.0
    %251 = vmatprep.subr.mxu0 0.0
    %252 = vmatpush1.msra.mxu0 0.0
    %253 = vmatprep.subr.mxu0 0.0
    %254 = vmatpush1.msra.mxu0 0.0
    %255 = vmatprep.subr.mxu0 0.0
    %256 = vmatpush1.msra.mxu0 0.0
    %257 = vmatprep.subr.mxu0 0.0
    %258 = vmatpush1.msra.mxu0 0.0
    %259 = vmatprep.subr.mxu0 0.0
    %260 = vmatpush1.msra.mxu0 %v225
    %261 = vmatprep.subr.mxu0 0.0
    %262 = vmatpush1.msra.mxu0 %v224
    %263 = vmatprep.subr.mxu0 0.0
    %264 = vmatpush1.msra.mxu0 %v223
    %265 = vmatprep.subr.mxu0 0.0
    %266 = vmatpush1.msra.mxu0 %v222
    %267 = vmatprep.subr.mxu0 0.0
    %268 = vmatpush2.msra.mxu0 0.0
    %269 = vmatprep.subr.mxu0 0.0
    %270 = vmatpush2.msra.mxu0 0.0
    %271 = vmatprep.subr.mxu0 0.0
    %272 = vmatpush2.msra.mxu0 0.0
    %273 = vmatprep.subr.mxu0 0.0
    %274 = vmatpush2.msra.mxu0 0.0
    %275 = vmatprep.subr.mxu0 0.0
    %276 = vmatpush2.msra.mxu0 0.0
    %277 = vmatprep.subr.mxu0 0.0
    %278 = vmatpush2.msra.mxu0 0.0
    %279 = vmatprep.subr.mxu0 0.0
    %280 = vmatpush2.msra.mxu0 0.0
    %281 = vmatprep.subr.mxu0 0.0
    %282 = vmatpush2.msra.mxu0 0.0
    %283 = vmatprep.subr.mxu0 0.0
    %284 = vmatpush2.msra.mxu0 0.0
    %285 = vmatprep.subr.mxu0 0.0
    %286 = vmatpush2.msra.mxu0 0.0
    %287 = vmatprep.subr.mxu0 0.0
    %288 = vmatpush2.msra.mxu0 0.0
    %289 = vmatprep.subr.mxu0 0.0
    %290 = vmatpush2.msra.mxu0 0.0
    %291 = vmatprep.subr.mxu0 0.0
    %292 = vmatpush2.msra.mxu0 0.0
    %293 = vmatprep.subr.mxu0 0.0
    %294 = vmatpush2.msra.mxu0 0.0
    %295 = vmatprep.subr.mxu0 0.0
    %296 = vmatpush2.msra.mxu0 0.0
    %297 = vmatprep.subr.mxu0 0.0
    %298 = vmatpush2.msra.mxu0 0.0
    %299 = vmatprep.mubr.f32.mxu0 0.0
    %300 = vmatmul.mubr.f32.gmra.mxu0 %v233
    %v301 = vpop.f32.mrf.mxu0
    %v302 = vadd.f32 %v231, %v301
    %v303 = vpop.f32.mrf.mxu0
    %304 = vdwg.mxu0
    %vm305 = vcmask 253952
    %306 = vst.msk [vmem:[%s4 + $0x8] sm:$0x1] %vm305, %v302
    // Predicated region
    $region46: #{encoder_rnn_forward.1} parent=1 // pred_check
      _
    $region47: #{encoder_rnn_forward.1} parent=1 // pred_check_branch
      %308 = sbr.rel (0) target = $region49
    $region48: #{encoder_rnn_forward.1} parent=1 // pred_region
      _
    $region49: #{encoder_rnn_forward.1} parent=1 // pred_fallthru
      _
    // Predicated region
    $region50: #{encoder_rnn_forward.1} parent=1 // pred_check
      _
    $region51: #{encoder_rnn_forward.1} parent=1 // pred_check_branch
      %310 = sbr.rel (0) target = $region53
    $region52: #{encoder_rnn_forward.1} parent=1 // pred_region
      _
    $region53: #{encoder_rnn_forward.1} parent=1 // pred_fallthru
      _
    %311 = vsyncpa [#allocation7], 1
  %312 = vsyncmov [#allocation3]
  %s313 = vpop.sfrf %312
  %p314 = scmp.eq.s32.totalorder %s313, 0
  %p315 = pneg %p314
  %317 = shalt.err (%p315)
  %s318 = scalar_lea.sflag [#allocation3], 1
  %319 = vsyncmov %s318
  %s320 = vpop.sfrf %319
  %p321 = scmp.eq.s32.totalorder %s320, 0
  %p322 = pneg %p321
  %324 = shalt.err (%p322)
  %s325 = scalar_lea.sflag [#allocation3], 2
  %326 = vsyncmov %s325
  %s327 = vpop.sfrf %326
  %p328 = scmp.eq.s32.totalorder %s327, 0
  %p329 = pneg %p328
  %331 = shalt.err (%p329)
  %s332 = scalar_lea.sflag [#allocation3], 3
  %333 = vsyncmov %s332
  %s334 = vpop.sfrf %333
  %p335 = scmp.eq.s32.totalorder %s334, 0
  %p336 = pneg %p335
  %338 = shalt.err (%p336)
  %s339 = scalar_lea.sflag [#allocation3], 4
  %340 = vsyncmov %s339
  %s341 = vpop.sfrf %340
  %p342 = scmp.eq.s32.totalorder %s341, 0
  %p343 = pneg %p342
  %345 = shalt.err (%p343)
  %s346 = scalar_lea.sflag [#allocation3], 5
  %347 = vsyncmov %s346
  %s348 = vpop.sfrf %347
  %p349 = scmp.eq.s32.totalorder %s348, 0
  %p350 = pneg %p349
  %352 = shalt.err (%p350)
  %s353 = scalar_lea.sflag [#allocation3], 6
  %354 = vsyncmov %s353
  %s355 = vpop.sfrf %354
  %p356 = scmp.eq.s32.totalorder %s355, 0
  %p357 = pneg %p356
  %359 = shalt.err (%p357)
  %s360 = scalar_lea.sflag [#allocation3], 7
  %361 = vsyncmov %s360
  %s362 = vpop.sfrf %361
  %p363 = scmp.eq.s32.totalorder %s362, 0
  %p364 = pneg %p363
  %366 = shalt.err (%p364)

</llo_original>
